<compile_context>
chip_gen: v7x
topology: tpu7x:2x2x1
jax: 0.10.0
libtpu: 0.0.40
codegen_flags: <defaults>
</compile_context>

<pallas_src>
import jax
import jax.numpy as jnp
from jax.experimental import pallas as pl
from jax.experimental.pallas import tpu as pltpu

BN_EPS = 1e-3  # matches nn.BatchNorm2d(out_ch, eps=0.001)


def _conv_stats_kernel(p_ref, w_ref, conv_ref, sum_ref, ssum_ref):
    # p_ref:    (K, TM)      bf16 im2col patch tile (lane axis = M)
    # w_ref:    (Cout, K)    bf16 folded conv weight
    # conv_ref: (Cout, TM)   f32 conv output tile (lane-dense writeback)
    # sum_ref:  (1, Cout, 1) f32 per-tile per-channel sum
    # ssum_ref: (1, Cout, 1) f32 per-tile per-channel sum of squares
    acc = jnp.dot(w_ref[...], p_ref[...], preferred_element_type=jnp.float32)
    conv_ref[...] = acc
    sum_ref[...] = jnp.sum(acc, axis=1, keepdims=True)[None]
    ssum_ref[...] = jnp.sum(acc * acc, axis=1, keepdims=True)[None]


def _bn_relu_kernel(conv_ref, scale_ref, shift_ref, o_ref):
    # conv_ref: (Cout, TM) f32; scale/shift: (Cout, 1) f32; o_ref: (Cout, TM)
    y = conv_ref[...] * scale_ref[...] + shift_ref[...]
    o_ref[...] = jnp.maximum(y, 0.0).astype(o_ref.dtype)


def conv2d_bn_relu(x_nchw, weight_oihw, bias, gamma, beta,
                   stride=1, padding=0, dilation=1, tile_m=128):
    """Forward pass of Conv2dBnRelu.  x: (N, Cin, H, W) -> (N, Cout, OH, OW)."""
    # NOTE: bias is a per-channel constant added before training-mode BN, so it
    # is exactly cancelled by the mean subtraction; dropping it is a no-op.
    del bias
    N, Cin, H, W = x_nchw.shape
    Cout, _, KH, KW = weight_oihw.shape
    OH = (H + 2 * padding - dilation * (KH - 1) - 1) // stride + 1
    OW = (W + 2 * padding - dilation * (KW - 1) - 1) // stride + 1
    M = N * OH * OW
    K = KH * KW * Cin

    # ---- glue: im2col in (K, M) layout, K ordered (kh, kw, cin) ----
    # TODO(synk): the KH*KW im2col copies still round-trip through HBM; a
    # per-tap windowed DMA from the padded activation would cut that ~KH*KW x.
    x = x_nchw
    if padding > 0:
        x = jnp.pad(x, ((0, 0), (0, 0), (padding, padding), (padding, padding)))
    taps = []
    for kh in range(KH):
        for kw in range(KW):
            h0, w0 = kh * dilation, kw * dilation
            patch = x[:, :, h0:h0 + stride * (OH - 1) + 1:stride,
                      w0:w0 + stride * (OW - 1) + 1:stride]      # (N, Cin, OH, OW)
            taps.append(jnp.transpose(patch, (1, 0, 2, 3)).reshape(Cin, M))
    patches = jnp.concatenate(taps, axis=0).astype(jnp.bfloat16)  # (K, M)

    w2d = jnp.transpose(weight_oihw, (0, 2, 3, 1)).reshape(Cout, K)
    w2d = w2d.astype(jnp.bfloat16)

    # Pad M up to a tile multiple.  Zero patch columns contribute 0 to both
    # sum and sum-of-squares, and stats are divided by the real M, so the
    # batch statistics remain exact.
    m_pad = pl.cdiv(M, tile_m) * tile_m
    if m_pad != M:
        patches = jnp.pad(patches, ((0, 0), (0, m_pad - M)))
    gm = m_pad // tile_m

    # tile_m should be re-derived per generation (v7x has 64 MiB VMEM / TC);
    # for real layers pick the largest multiple of 128 that fits the budget.
    cparams = pltpu.CompilerParams(dimension_semantics=("parallel",),
                                   vmem_limit_bytes=48 * 1024 * 1024)

    # ---- phase 1: conv GEMM per M tile + per-tile BN partial sums ----
    conv_f32, sums, ssums = pl.pallas_call(
        _conv_stats_kernel,
        out_shape=(jax.ShapeDtypeStruct((Cout, m_pad), jnp.float32),
                   jax.ShapeDtypeStruct((gm, Cout, 1), jnp.float32),
                   jax.ShapeDtypeStruct((gm, Cout, 1), jnp.float32)),
        grid_spec=pltpu.PrefetchScalarGridSpec(
            num_scalar_prefetch=0, grid=(gm,),
            in_specs=[pl.BlockSpec((K, tile_m), lambda i: (0, i)),
                      pl.BlockSpec((Cout, K), lambda i: (0, 0))],
            out_specs=[pl.BlockSpec((Cout, tile_m), lambda i: (0, i)),
                       pl.BlockSpec((1, Cout, 1), lambda i: (i, 0, 0)),
                       pl.BlockSpec((1, Cout, 1), lambda i: (i, 0, 0))]),
        compiler_params=cparams,
    )(patches, w2d)

    # ---- combine partial stats (tiny) and fold BN into scale/shift ----
    tot_s = jnp.sum(sums[:, :, 0], axis=0)                  # (Cout,)
    tot_ss = jnp.sum(ssums[:, :, 0], axis=0)                # (Cout,)
    mean = tot_s / M
    var = jnp.maximum(tot_ss / M - mean * mean, 0.0)        # biased variance
    inv_std = jax.lax.rsqrt(var + BN_EPS)
    scale = (gamma * inv_std).astype(jnp.float32)
    shift = (beta - mean * gamma * inv_std).astype(jnp.float32)

    # ---- phase 2: per-channel scale/shift + ReLU, tiled over M ----
    out2d = pl.pallas_call(
        _bn_relu_kernel,
        out_shape=jax.ShapeDtypeStruct((Cout, m_pad), x_nchw.dtype),
        grid_spec=pltpu.PrefetchScalarGridSpec(
            num_scalar_prefetch=0, grid=(gm,),
            in_specs=[pl.BlockSpec((Cout, tile_m), lambda i: (0, i)),
                      pl.BlockSpec((Cout, 1), lambda i: (0, 0)),
                      pl.BlockSpec((Cout, 1), lambda i: (0, 0))],
            out_specs=pl.BlockSpec((Cout, tile_m), lambda i: (0, i))),
        compiler_params=cparams,
    )(conv_f32, scale.reshape(Cout, 1), shift.reshape(Cout, 1))

    out = out2d[:, :M].reshape(Cout, N, OH, OW)
    # TODO(synk): BatchNorm running_mean/running_var updates (training-time
    # side effect, not part of the forward output) are not materialized.
    return jnp.transpose(out, (1, 0, 2, 3))                  # back to NCHW


def _reference(x, w, b, gamma, beta, stride, padding, dilation):
    """Pure-JAX reference reproducing the PyTorch forward (training-mode BN)."""
    conv = jax.lax.conv_general_dilated(
        x, w, window_strides=(stride, stride),
        padding=((padding, padding), (padding, padding)),
        rhs_dilation=(dilation, dilation),
        dimension_numbers=("NCHW", "OIHW", "NCHW"),
        precision=jax.lax.Precision.HIGHEST)
    conv = conv + b[None, :, None, None]
    mean = conv.mean(axis=(0, 2, 3), keepdims=True)
    var = ((conv - mean) ** 2).mean(axis=(0, 2, 3), keepdims=True)
    y = (conv - mean) / jnp.sqrt(var + BN_EPS)
    y = y * gamma[None, :, None, None] + beta[None, :, None, None]
    return jnp.maximum(y, 0.0)


if __name__ == "__main__":
    # Conv2dBnRelu(in_ch=4, out_ch=8, kernel_size=3, stride=1, padding=1)
    N, Cin, H, W = 2, 4, 16, 16
    Cout, KH, KW = 8, 3, 3
    stride, padding, dilation = 1, 1, 1

    key = jax.random.PRNGKey(0)
    k1, k2, k3, k4, k5 = jax.random.split(key, 5)
    x = jax.random.normal(k1, (N, Cin, H, W), jnp.float32)
    weight = 0.1 * jax.random.normal(k2, (Cout, Cin, KH, KW), jnp.float32)
    bias = 0.1 * jax.random.normal(k3, (Cout,), jnp.float32)
    gamma = 1.0 + 0.1 * jax.random.normal(k4, (Cout,), jnp.float32)
    beta = 0.1 * jax.random.normal(k5, (Cout,), jnp.float32)

    out = conv2d_bn_relu(x, weight, bias, gamma, beta,
                         stride=stride, padding=padding, dilation=dilation,
                         tile_m=128)
    out = jax.block_until_ready(out)

    ref = _reference(x, weight, bias, gamma, beta, stride, padding, dilation)
    if out.shape != ref.shape:
        raise AssertionError(f"shape mismatch: {out.shape} vs {ref.shape}")
    if not jnp.allclose(out, ref, atol=2e-2, rtol=2e-2):
        max_err = float(jnp.max(jnp.abs(out - ref)))
        raise AssertionError(f"mismatch vs reference, max abs err = {max_err}")
    print("KERNEL_OK")
</pallas_src>

<mosaic_0001>
module attributes {stable_mosaic.version = 11 : i64} {
  func.func @_conv_stats_kernel(%arg0: i32, %arg1: memref<36x128xbf16, #tpu.memory_space<vmem>>, %arg2: memref<8x36xbf16, #tpu.memory_space<vmem>>, %arg3: memref<8x128xf32, #tpu.memory_space<vmem>>, %arg4: memref<1x8x1xf32, #tpu.memory_space<vmem>>, %arg5: memref<1x8x1xf32, #tpu.memory_space<vmem>>) attributes {dimension_semantics = [#tpu.dimension_semantics<parallel>], iteration_bounds = array<i64: 4>, scalar_prefetch = 0 : i64, scratch_operands = 0 : i64, tpu.core_type = #tpu.core_type<tc>, window_params = [{transform_indices = @transform_0, window_bounds = array<i64: 36, 128>}, {pipeline_mode = #tpu.pipeline_mode<synchronous>, transform_indices = @transform_1, window_bounds = array<i64: 8, 36>}, {transform_indices = @transform_2, window_bounds = array<i64: 8, 128>}, {transform_indices = @transform_3, window_bounds = array<i64: 1, 8, 1>}, {transform_indices = @transform_4, window_bounds = array<i64: 1, 8, 1>}]} {
    %c0 = arith.constant 0 : index
    %c0_0 = arith.constant 0 : index
    %0 = vector.load %arg2[%c0, %c0_0] : memref<8x36xbf16, #tpu.memory_space<vmem>>, vector<8x36xbf16>
    %c0_1 = arith.constant 0 : index
    %c0_2 = arith.constant 0 : index
    %1 = vector.load %arg1[%c0_1, %c0_2] : memref<36x128xbf16, #tpu.memory_space<vmem>>, vector<36x128xbf16>
    %cst = arith.constant dense<0.000000e+00> : vector<8x128xf32>
    %2 = tpu.matmul %0, %1, %cst {dimension_numbers = #tpu.dot_dimension_numbers<[1], [0], [0], [1], [0, 0, 1, 1], [], []>} : vector<8x36xbf16>, vector<36x128xbf16>, vector<8x128xf32> -> vector<8x128xf32>
    %c0_3 = arith.constant 0 : index
    %c0_4 = arith.constant 0 : index
    %3 = vector.load %arg3[%c0_3, %c0_4] : memref<8x128xf32, #tpu.memory_space<vmem>>, vector<8x128xf32>
    tpu.vector_store %arg3[%c0_3, %c0_4], %2 {strides = array<i32>} : memref<8x128xf32, #tpu.memory_space<vmem>>, vector<8x128xf32>,
    %cst_5 = arith.constant dense<0.000000e+00> : vector<8xf32>
    %4 = vector.multi_reduction <add>, %2, %cst_5 [1] : vector<8x128xf32> to vector<8xf32>
    %5 = vector.shape_cast %4 : vector<8xf32> to vector<8x1xf32>
    %6 = vector.shape_cast %5 : vector<8x1xf32> to vector<1x8x1xf32>
    %c0_6 = arith.constant 0 : index
    %c0_7 = arith.constant 0 : index
    %c0_8 = arith.constant 0 : index
    %7 = vector.load %arg4[%c0_6, %c0_7, %c0_8] : memref<1x8x1xf32, #tpu.memory_space<vmem>>, vector<1x8x1xf32>
    tpu.vector_store %arg4[%c0_6, %c0_7, %c0_8], %6 {strides = array<i32>} : memref<1x8x1xf32, #tpu.memory_space<vmem>>, vector<1x8x1xf32>,
    %8 = arith.mulf %2, %2 : vector<8x128xf32>
    %cst_9 = arith.constant dense<0.000000e+00> : vector<8xf32>
    %9 = vector.multi_reduction <add>, %8, %cst_9 [1] : vector<8x128xf32> to vector<8xf32>
    %10 = vector.shape_cast %9 : vector<8xf32> to vector<8x1xf32>
    %11 = vector.shape_cast %10 : vector<8x1xf32> to vector<1x8x1xf32>
    %c0_10 = arith.constant 0 : index
    %c0_11 = arith.constant 0 : index
    %c0_12 = arith.constant 0 : index
    %12 = vector.load %arg5[%c0_10, %c0_11, %c0_12] : memref<1x8x1xf32, #tpu.memory_space<vmem>>, vector<1x8x1xf32>
    tpu.vector_store %arg5[%c0_10, %c0_11, %c0_12], %11 {strides = array<i32>} : memref<1x8x1xf32, #tpu.memory_space<vmem>>, vector<1x8x1xf32>,
    return
  }
  func.func @transform_0(%arg0: i32) -> (i32, i32) {
    %c0_i32 = arith.constant 0 : i32
    %c0_i32_0 = arith.constant 0 : i32
    return %c0_i32, %arg0 : i32, i32
  }
  func.func @transform_1(%arg0: i32) -> (i32, i32) {
    %c0_i32 = arith.constant 0 : i32
    %c0_i32_0 = arith.constant 0 : i32
    %c0_i32_1 = arith.constant 0 : i32
    return %c0_i32, %c0_i32_0 : i32, i32
  }
  func.func @transform_2(%arg0: i32) -> (i32, i32) {
    %c0_i32 = arith.constant 0 : i32
    %c0_i32_0 = arith.constant 0 : i32
    return %c0_i32, %arg0 : i32, i32
  }
  func.func @transform_3(%arg0: i32) -> (i32, i32, i32) {
    %c0_i32 = arith.constant 0 : i32
    %c0_i32_0 = arith.constant 0 : i32
    %c0_i32_1 = arith.constant 0 : i32
    return %arg0, %c0_i32, %c0_i32_0 : i32, i32, i32
  }
  func.func @transform_4(%arg0: i32) -> (i32, i32, i32) {
    %c0_i32 = arith.constant 0 : i32
    %c0_i32_0 = arith.constant 0 : i32
    %c0_i32_1 = arith.constant 0 : i32
    return %arg0, %c0_i32, %c0_i32_0 : i32, i32, i32
  }
}

</mosaic_0001>

<llo_original>
// kernel: tpu_custom_call.1
$region0: #{tpu_custom_call.1}
  #allocation0 [shape = 'u32[]', space=smem, size = 0x4, offset = 0x4, fixed_abs, tag = 'smem constant byte address 0x4 - core index']
  #allocation1 [shape = 'u32[144,128]{1,0:T(1,128)}', space=vmem, size = 0x12000, scoped, tag = 'internal scratch']
  %s0 = inlined_call_operand.hbm [shape: bf16[36,512], index: 0, kind: input, shape index: {}]
  %s1 = inlined_call_operand.hbm [shape: bf16[8,36], index: 1, kind: input, shape index: {}]
  %s2 = inlined_call_operand.hbm [shape: f32[8,512], index: 2, kind: output, shape index: {0}]
  %s3 = inlined_call_operand.vmem [shape: f32[4,8,1], index: 3, kind: output, shape index: {1}]
  %s4 = inlined_call_operand.vmem [shape: f32[4,8,1], index: 4, kind: output, shape index: {2}]
  %5 = xla_tuple %s2, %s3, %s4
  %s6 = sld [smem:[#allocation0]]
  $region65: #{tpu_custom_call.1} parent=0
    _
  %s8 = ssub.s32 1, %s6
  %s9 = scalar_select 0, %s8, %s6
  $region1: #{tpu_custom_call.1} parent=0
    #allocation2 [shape = 'u8[20480]{0}', space=vmem, size = 0x5000, scoped, tag = 'input window, operand 0']
    #allocation3 [shape = 's32[2]{0}', space=sflag, size = 0x8, scoped, tag = 'scoped memory for tpu_custom_call.1']
    #allocation4 [shape = 's32[2]{0}', space=sflag, size = 0x8, scoped, tag = 'scoped memory for tpu_custom_call.1']
    #allocation5 [shape = 'u8[2048]{0}', space=vmem, size = 0x800, scoped, tag = 'input window, operand 1, single buffered']
    #allocation6 [shape = 's32[1]{0}', space=sflag, size = 0x4, scoped, tag = 'scoped memory for tpu_custom_call.1']
    #allocation7 [shape = 'u8[8192]{0}', space=vmem, size = 0x2000, scoped, tag = 'output window, operand 0']
    %10 = vsyncpa [#allocation3], 0
    %s11 = scalar_lea.sflag [#allocation3], 1
    %12 = vsyncpa %s11, 0
    %13 = vsyncpa [#allocation6], 0
    %14 = vsyncpa [#allocation4], 0
    %s15 = scalar_lea.sflag [#allocation4], 1
    %16 = vsyncpa %s15, 0
    loop: start=0, step=1, limit=6
    $region2: #{tpu_custom_call.1} parent=1 // loop_pre_header
      _
    $region3: #{tpu_custom_call.1} parent=1 // loop_header
      %s18 = sphi 0, %s22
      %p19 = scmp.ge.s32.totalorder %s18, 6
      %s28 = sphi 0, %s30
      %s31 = sphi 0, %s28
      %s32 = sphi 0, %s31
      %s48 = sphi 0, %s32
      %s52 = sphi 0, %s52
      %s54 = sphi 0, %s52
      %s55 = sphi 0, %s54
      %s69 = sphi 0, %s55
      %s75 = sphi 0, %s77
      %s78 = sphi 0, %s75
      %s79 = sphi 0, %s78
      %s95 = sphi 0, %s79
      %s101 = sphi 0, %s103
      %s104 = sphi 0, %s101
      %s105 = sphi 0, %s104
      %s121 = sphi 0, %s105
      %s127 = sphi 0, %s129
      %s130 = sphi 0, %s127
      %s131 = sphi 0, %s130
      %s147 = sphi 0, %s131
    $region4: #{tpu_custom_call.1} parent=1 // loop_header_branch
      %21 = sbr.rel (%p19) target = $region8
    $region5: #{tpu_custom_call.1} parent=1 // loop_body
      %s23 = ssub.s32 %s18, 1
      %s24 = ssub.s32 %s18, 2
      %s25 = sadd.s32 %s18, 1
      %s26 = ssub.s32 %s18, %s25
      %p27 = scmp.eq.s32.totalorder %s26, 0
      %s29 = sadd.s32 %s28, 1
      %s30 = scalar_select %p27, %s28, %s29
      %p33 = pneg %p27
      %p34 = scmp.eq.s32.totalorder %s18, 3
      %p35 = por %p33, %p34
      %p36 = scmp.ne.s32.totalorder %s28, %s31
      %p37 = scmp.eq.s32.totalorder %s18, 0
      %p38 = por %p36, %p37
      %p39 = scmp.ne.s32.totalorder %s28, %s31
      %p40 = scmp.eq.s32.totalorder %s23, 3
      %p41 = por %p39, %p40
      %p42 = scmp.ne.s32.totalorder %s31, %s32
      %p43 = scmp.eq.s32.totalorder %s23, 0
      %p44 = por %p42, %p43
      %p45 = scmp.ne.s32.totalorder %s31, %s32
      %p46 = scmp.eq.s32.totalorder %s24, 3
      %p47 = por %p45, %p46
      %p49 = scmp.ne.s32.totalorder %s32, %s48
      %p50 = scmp.eq.s32.totalorder %s24, 0
      %p51 = por %p49, %p50
      %s53 = sadd.s32 %s52, 1
      %p56 = scmp.eq.s32.totalorder %s18, 3
      %p57 = scmp.ne.s32.totalorder %s52, %s54
      %p58 = scmp.eq.s32.totalorder %s18, 0
      %p59 = por %p57, %p58
      %p60 = scmp.ne.s32.totalorder %s52, %s54
      %p61 = scmp.eq.s32.totalorder %s23, 3
      %p62 = por %p60, %p61
      %p63 = scmp.ne.s32.totalorder %s54, %s55
      %p64 = scmp.eq.s32.totalorder %s23, 0
      %p65 = por %p63, %p64
      %p66 = scmp.ne.s32.totalorder %s54, %s55
      %p67 = scmp.eq.s32.totalorder %s24, 3
      %p68 = por %p66, %p67
      %p70 = scmp.ne.s32.totalorder %s55, %s69
      %p71 = scmp.eq.s32.totalorder %s24, 0
      %p72 = por %p70, %p71
      %s73 = ssub.s32 %s18, %s25
      %p74 = scmp.eq.s32.totalorder %s73, 0
      %s76 = sadd.s32 %s75, 1
      %s77 = scalar_select %p74, %s75, %s76
      %p80 = pneg %p74
      %p81 = scmp.eq.s32.totalorder %s18, 3
      %p82 = por %p80, %p81
      %p83 = scmp.ne.s32.totalorder %s75, %s78
      %p84 = scmp.eq.s32.totalorder %s18, 0
      %p85 = por %p83, %p84
      %p86 = scmp.ne.s32.totalorder %s75, %s78
      %p87 = scmp.eq.s32.totalorder %s23, 3
      %p88 = por %p86, %p87
      %p89 = scmp.ne.s32.totalorder %s78, %s79
      %p90 = scmp.eq.s32.totalorder %s23, 0
      %p91 = por %p89, %p90
      %p92 = scmp.ne.s32.totalorder %s78, %s79
      %p93 = scmp.eq.s32.totalorder %s24, 3
      %p94 = por %p92, %p93
      %p96 = scmp.ne.s32.totalorder %s79, %s95
      %p97 = scmp.eq.s32.totalorder %s24, 0
      %p98 = por %p96, %p97
      %s99 = ssub.s32 %s18, %s25
      %p100 = scmp.eq.s32.totalorder %s99, 0
      %s102 = sadd.s32 %s101, 1
      %s103 = scalar_select %p100, %s101, %s102
      %p106 = pneg %p100
      %p107 = scmp.eq.s32.totalorder %s18, 3
      %p108 = por %p106, %p107
      %p109 = scmp.ne.s32.totalorder %s101, %s104
      %p110 = scmp.eq.s32.totalorder %s18, 0
      %p111 = por %p109, %p110
      %p112 = scmp.ne.s32.totalorder %s101, %s104
      %p113 = scmp.eq.s32.totalorder %s23, 3
      %p114 = por %p112, %p113
      %p115 = scmp.ne.s32.totalorder %s104, %s105
      %p116 = scmp.eq.s32.totalorder %s23, 0
      %p117 = por %p115, %p116
      %p118 = scmp.ne.s32.totalorder %s104, %s105
      %p119 = scmp.eq.s32.totalorder %s24, 3
      %p120 = por %p118, %p119
      %p122 = scmp.ne.s32.totalorder %s105, %s121
      %p123 = scmp.eq.s32.totalorder %s24, 0
      %p124 = por %p122, %p123
      %s125 = ssub.s32 %s18, %s25
      %p126 = scmp.eq.s32.totalorder %s125, 0
      %s128 = sadd.s32 %s127, 1
      %s129 = scalar_select %p126, %s127, %s128
      %p132 = pneg %p126
      %p133 = scmp.eq.s32.totalorder %s18, 3
      %p134 = por %p132, %p133
      %p135 = scmp.ne.s32.totalorder %s127, %s130
      %p136 = scmp.eq.s32.totalorder %s18, 0
      %p137 = por %p135, %p136
      %p138 = scmp.ne.s32.totalorder %s127, %s130
      %p139 = scmp.eq.s32.totalorder %s23, 3
      %p140 = por %p138, %p139
      %p141 = scmp.ne.s32.totalorder %s130, %s131
      %p142 = scmp.eq.s32.totalorder %s23, 0
      %p143 = por %p141, %p142
      %p144 = scmp.ne.s32.totalorder %s130, %s131
      %p145 = scmp.eq.s32.totalorder %s24, 3
      %p146 = por %p144, %p145
      %p148 = scmp.ne.s32.totalorder %s131, %s147
      %p149 = scmp.eq.s32.totalorder %s24, 0
      %p150 = por %p148, %p149
      %p151 = scmp.le.s32.totalorder 1, %s18
      %p152 = scmp.lt.s32.totalorder %s18, 5
      %p153 = pnand %p151, %p152
      %p154 = pneg %p153
      // Predicated region
      $region9: #{tpu_custom_call.1} parent=5 // pred_check
        _
      $region10: #{tpu_custom_call.1} parent=5 // pred_check_branch
        %156 = sbr.rel (%p153) target = $region12
      $region11: #{tpu_custom_call.1} parent=5 // pred_region
        %s157 = ssub.s32 %s18, 1
        // Predicated region
        $region13: #{tpu_custom_call.1} parent=11 // pred_check
          %p158 = pneg %p65
        $region14: #{tpu_custom_call.1} parent=11 // pred_check_branch
          %160 = sbr.rel (%p158) target = $region16
        $region15: #{tpu_custom_call.1} parent=11 // pred_region
          %s162 = ssub.s32 64, 64
          %163 = vsyncadd [#allocation6], %s162
          %s165 = sshll.u32 [#allocation5], 4
          %s166 = int_to_ptr.vmem [resolvable:$true] %s165
          %168 = dma.hbm_to_vmem [thread:$0]  %s1, 64, %s166, [#allocation6]
        $region16: #{tpu_custom_call.1} parent=11 // pred_fallthru
          _
      $region12: #{tpu_custom_call.1} parent=5 // pred_fallthru
        _
      %p169 = scmp.lt.s32.totalorder %s18, 4
      // Predicated region
      $region17: #{tpu_custom_call.1} parent=5 // pred_check
        %p170 = pneg %p169
      $region18: #{tpu_custom_call.1} parent=5 // pred_check_branch
        %172 = sbr.rel (%p170) target = $region20
      $region19: #{tpu_custom_call.1} parent=5 // pred_region
        // Predicated region
        $region21: #{tpu_custom_call.1} parent=19 // pred_check
          %p173 = pneg %p38
        $region22: #{tpu_custom_call.1} parent=19 // pred_check_branch
          %175 = sbr.rel (%p173) target = $region24
        $region23: #{tpu_custom_call.1} parent=19 // pred_region
          %s176 = sand.u32 %s28, 1
          %s177 = scalar_lea.sflag [#allocation3], %s176
          %s178 = sand.u32 %s28, 1
          %s179 = smul.addr %s178, 20
          %s180 = scalar_lea.vmem [#allocation2], %s179
          %s182 = ssub.s32 320, 320
          %183 = vsyncadd %s177, %s182
          %s184 = smul.addr %s18, 64
          %s185 = scalar_lea.hbm %s0, %s184
          %s186 = sshll.u32 %s180, 4
          %s187 = int_to_ptr.vmem [resolvable:$true] %s186
          %192 = dma.hbm_to_vmem [thread:$0]  %s185, 320, %s187, %s177, 256, 64, 4
        $region24: #{tpu_custom_call.1} parent=19 // pred_fallthru
          _
      $region20: #{tpu_custom_call.1} parent=5 // pred_fallthru
        _
      %p193 = scmp.le.s32.totalorder 1, %s18
      %p194 = scmp.lt.s32.totalorder %s18, 5
      %p195 = pnand %p193, %p194
      %p196 = pneg %p195
      // Predicated region
      $region25: #{tpu_custom_call.1} parent=5 // pred_check
        _
      $region26: #{tpu_custom_call.1} parent=5 // pred_check_branch
        %198 = sbr.rel (%p195) target = $region28
      $region27: #{tpu_custom_call.1} parent=5 // pred_region
        %s199 = ssub.s32 %s18, 1
        %s200 = sand.u32 %s31, 1
        %s201 = scalar_lea.sflag [#allocation3], %s200
        %s202 = sand.u32 %s31, 1
        %s203 = smul.addr %s202, 20
        %s204 = scalar_lea.vmem [#allocation2], %s203
        // Predicated region
        $region29: #{tpu_custom_call.1} parent=27 // pred_check
          %p205 = pneg %p44
        $region30: #{tpu_custom_call.1} parent=27 // pred_check_branch
          %207 = sbr.rel (%p205) target = $region32
        $region31: #{tpu_custom_call.1} parent=27 // pred_region
          %208 = dma.done %s201, 320
        $region32: #{tpu_custom_call.1} parent=27 // pred_fallthru
          _
        // Predicated region
        $region33: #{tpu_custom_call.1} parent=27 // pred_check
          %p209 = pneg %p65
        $region34: #{tpu_custom_call.1} parent=27 // pred_check_branch
          %211 = sbr.rel (%p209) target = $region36
        $region35: #{tpu_custom_call.1} parent=27 // pred_region
          %212 = dma.done [#allocation6], 64
        $region36: #{tpu_custom_call.1} parent=27 // pred_fallthru
          _
        %s213 = sand.u32 %s31, 1
        %s214 = scalar_lea.sflag [#allocation3], %s213
        %s215 = sand.u32 %s31, 1
        %s216 = smul.addr %s215, 20
        %s217 = scalar_lea.vmem [#allocation2], %s216
        %p218 = pneg %p44
        %p219 = pneg %p41
        %p220 = pneg %p65
        %p221 = pneg %p62
        %p222 = pneg %p91
        %p223 = pneg %p88
        %s224 = sand.u32 %s78, 1
        %s225 = scalar_lea.sflag [#allocation4], %s224
        %s226 = sand.u32 %s78, 1
        %s227 = smul.addr %s226, 8
        %s228 = scalar_lea.vmem [#allocation7], %s227
        %p229 = pneg %p117
        %p230 = pneg %p114
        %p231 = scmp.lt.s32.totalorder %s23, 3
        %s232 = scalar_select %p231, %s23, 3
        %s233 = smul.addr %s232, 8
        %s234 = scalar_lea.vmem %s3, %s233
        %p235 = pneg %p143
        %p236 = pneg %p140
        %p237 = scmp.lt.s32.totalorder %s23, 3
        %s238 = scalar_select %p237, %s23, 3
        %s239 = smul.addr %s238, 8
        %s240 = scalar_lea.vmem %s4, %s239
        %p241 = scmp.lt.s32.totalorder %s23, 3
        %s242 = scalar_select %p241, %s23, 3
        %s243 = smul.addr %s242, 8
        %s244 = scalar_lea.vmem %s3, %s243
        %p245 = scmp.lt.s32.totalorder %s23, 3
        %s246 = scalar_select %p245, %s23, 3
        %s247 = smul.addr %s246, 8
        %s248 = scalar_lea.vmem %s4, %s247
        %v250 = vld [vmem:[#allocation5] sm:$0xf]
        %v251 = vld [vmem:[%s204] sm:$0xf]
        %v252 = vld [vmem:[%s204 + $0x4] sm:$0xf]
        %v253 = vld [vmem:[%s204 + $0x8] sm:$0xf]
        %v254 = vld [vmem:[%s204 + $0xc] sm:$0xf]
        %v255 = vld [vmem:[%s204 + $0x10] sm:$0x3]
        %v261 = vunpack.c.l.b16 %v251
        %v262 = vunpack.c.l.b16 %v252
        %v263 = vunpack.c.l.b16 %v253
        %v264 = vunpack.c.l.b16 %v254
        %v265 = vunpack.c.l.b16 %v255
        %v266 = vpack.c.b16 %v262, %v261
        %v267 = vpack.c.b16 %v264, %v263
        %v268 = vpack.c.b16 %v265, %v265
        %vm271 = vcmask 293888
        %v273 = vsel %vm271, %v250, 0
        %vm275 = vcmask 1041408
        %v277 = vsel %vm275, %v268, 0
        %279 = vmatprep.subr.bf16.mxu0 0
        %280 = vmatpush1.bf16.msra.mxu0 %v266
        %281 = vmatprep.subr.bf16.mxu0 0
        %282 = vmatpush1.bf16.msra.mxu0 %v267
        %283 = vmatprep.subr.bf16.mxu0 0
        %284 = vmatpush1.bf16.msra.mxu0 %v277
        %285 = vmatprep.subr.bf16.mxu0 0
        %286 = vmatpush1.bf16.msra.mxu0 0
        %287 = vmatprep.subr.bf16.mxu0 0
        %288 = vmatpush1.bf16.msra.mxu0 0
        %289 = vmatprep.subr.bf16.mxu0 0
        %290 = vmatpush1.bf16.msra.mxu0 0
        %291 = vmatprep.subr.bf16.mxu0 0
        %292 = vmatpush1.bf16.msra.mxu0 0
        %293 = vmatprep.subr.bf16.mxu0 0
        %294 = vmatpush1.bf16.msra.mxu0 0
        %295 = vmatprep.subr.bf16.mxu0 0
        %296 = vmatpush1.bf16.msra.mxu0 0
        %297 = vmatprep.subr.bf16.mxu0 0
        %298 = vmatpush1.bf16.msra.mxu0 0
        %299 = vmatprep.subr.bf16.mxu0 0
        %300 = vmatpush1.bf16.msra.mxu0 0
        %301 = vmatprep.subr.bf16.mxu0 0
        %302 = vmatpush1.bf16.msra.mxu0 0
        %303 = vmatprep.subr.bf16.mxu0 0
        %304 = vmatpush1.bf16.msra.mxu0 0
        %305 = vmatprep.subr.bf16.mxu0 0
        %306 = vmatpush1.bf16.msra.mxu0 0
        %307 = vmatprep.subr.bf16.mxu0 0
        %308 = vmatpush1.bf16.msra.mxu0 0
        %309 = vmatprep.subr.bf16.mxu0 0
        %310 = vmatpush1.bf16.msra.mxu0 0
        %311 = vmatprep.mubr.bf16.mxu0 0
        %312 = vmatmul.mubr.bf16.gmra.mrb[0].mxu0 %v273
        %v313 = vpop.f32.mrb[0].mxu0
        %v314 = vadd.f32 0.0, %v313
        %v315 = vpop.f32.mrb[0].mxu0
        %v316 = vpop.f32.mrb[0].mxu0
        %v317 = vpop.f32.mrb[0].mxu0
        %318 = vdwg.mxu0
        %319 = vst [vmem:[%s228] sm:$0xff] %v314
        %320 = vadd.xlane.f32.xlu0 %v314
        %v321 = vpop.xlane.xlu0 %320
        %vm322 = vcmask 7168
        %323 = vst.msk [vmem:[%s244] sm:$0xff] %vm322, %v321
        %v324 = vmul.f32 %v314, %v314
        %325 = vadd.xlane.f32.xlu0 %v324
        %v326 = vpop.xlane.xlu0 %325
        %327 = vst.msk [vmem:[%s248] sm:$0xff] %vm322, %v326
        %s328 = sand.u32 %s78, 1
        %s329 = scalar_lea.sflag [#allocation4], %s328
        %s330 = sand.u32 %s78, 1
        %s331 = smul.addr %s330, 8
        %s332 = scalar_lea.vmem [#allocation7], %s331
        %p333 = scmp.lt.s32.totalorder %s23, 3
        %s334 = scalar_select %p333, %s23, 3
        %s335 = smul.addr %s334, 8
        %s336 = scalar_lea.vmem %s3, %s335
        %p337 = scmp.lt.s32.totalorder %s23, 3
        %s338 = scalar_select %p337, %s23, 3
        %s339 = smul.addr %s338, 8
        %s340 = scalar_lea.vmem %s4, %s339
        // Predicated region
        $region37: #{tpu_custom_call.1} parent=27 // pred_check
          %p341 = pneg %p88
        $region38: #{tpu_custom_call.1} parent=27 // pred_check_branch
          %343 = sbr.rel (%p341) target = $region40
        $region39: #{tpu_custom_call.1} parent=27 // pred_region
          %s345 = ssub.s32 128, 128
          %346 = vsyncadd %s329, %s345
          %s347 = smul.addr %s23, 128
          %s348 = scalar_lea.hbm %s2, %s347
          %s350 = sshll.u32 %s332, 4
          %s351 = int_to_ptr.vmem [resolvable:$true] %s350
          %353 = dma.vmem_to_hbm [thread:$0]  %s351, 128, %s348, %s329
        $region40: #{tpu_custom_call.1} parent=27 // pred_fallthru
          _
        // Predicated region
        $region41: #{tpu_custom_call.1} parent=27 // pred_check
          %p354 = pneg %p114
        $region42: #{tpu_custom_call.1} parent=27 // pred_check_branch
          %356 = sbr.rel (%p354) target = $region44
        $region43: #{tpu_custom_call.1} parent=27 // pred_region
          _
        $region44: #{tpu_custom_call.1} parent=27 // pred_fallthru
          _
        // Predicated region
        $region45: #{tpu_custom_call.1} parent=27 // pred_check
          %p357 = pneg %p140
        $region46: #{tpu_custom_call.1} parent=27 // pred_check_branch
          %359 = sbr.rel (%p357) target = $region48
        $region47: #{tpu_custom_call.1} parent=27 // pred_region
          _
        $region48: #{tpu_custom_call.1} parent=27 // pred_fallthru
          _
      $region28: #{tpu_custom_call.1} parent=5 // pred_fallthru
        _
      %p360 = scmp.le.s32.totalorder 2, %s18
      // Predicated region
      $region49: #{tpu_custom_call.1} parent=5 // pred_check
        %p361 = pneg %p360
      $region50: #{tpu_custom_call.1} parent=5 // pred_check_branch
        %363 = sbr.rel (%p361) target = $region52
      $region51: #{tpu_custom_call.1} parent=5 // pred_region
        %s364 = ssub.s32 %s18, 2
        // Predicated region
        $region53: #{tpu_custom_call.1} parent=51 // pred_check
          %p365 = pneg %p94
        $region54: #{tpu_custom_call.1} parent=51 // pred_check_branch
          %367 = sbr.rel (%p365) target = $region56
        $region55: #{tpu_custom_call.1} parent=51 // pred_region
          %s368 = sand.u32 %s79, 1
          %s369 = scalar_lea.sflag [#allocation4], %s368
          %s370 = sand.u32 %s79, 1
          %s371 = smul.addr %s370, 8
          %s372 = scalar_lea.vmem [#allocation7], %s371
          %373 = dma.done %s369, 128
        $region56: #{tpu_custom_call.1} parent=51 // pred_fallthru
          _
        // Predicated region
        $region57: #{tpu_custom_call.1} parent=51 // pred_check
          %p374 = pneg %p120
        $region58: #{tpu_custom_call.1} parent=51 // pred_check_branch
          %376 = sbr.rel (%p374) target = $region60
        $region59: #{tpu_custom_call.1} parent=51 // pred_region
          %p377 = scmp.lt.s32.totalorder %s24, 3
          %s378 = scalar_select %p377, %s24, 3
          %s379 = smul.addr %s378, 8
          %s380 = scalar_lea.vmem %s3, %s379
        $region60: #{tpu_custom_call.1} parent=51 // pred_fallthru
          _
        // Predicated region
        $region61: #{tpu_custom_call.1} parent=51 // pred_check
          %p381 = pneg %p146
        $region62: #{tpu_custom_call.1} parent=51 // pred_check_branch
          %383 = sbr.rel (%p381) target = $region64
        $region63: #{tpu_custom_call.1} parent=51 // pred_region
          %p384 = scmp.lt.s32.totalorder %s24, 3
          %s385 = scalar_select %p384, %s24, 3
          %s386 = smul.addr %s385, 8
          %s387 = scalar_lea.vmem %s4, %s386
        $region64: #{tpu_custom_call.1} parent=51 // pred_fallthru
          _
      $region52: #{tpu_custom_call.1} parent=5 // pred_fallthru
        _
    $region6: #{tpu_custom_call.1} parent=1 // loop_footer
      %s22 = sadd.s32 1, %s18
    $region7: #{tpu_custom_call.1} parent=1 // loop_footer_branch
      %17 = sbr.rel target = $region3
    $region8: #{tpu_custom_call.1} parent=1 // loop_exit
      _
    %388 = vsyncpa [#allocation3], 1
    %s389 = scalar_lea.sflag [#allocation3], 1
    %390 = vsyncpa %s389, 1
    %391 = vsyncpa [#allocation6], 1
    %392 = vsyncpa [#allocation4], 1
    %s393 = scalar_lea.sflag [#allocation4], 1
    %394 = vsyncpa %s393, 1

</llo_original>
